<compile_context>
chip_gen: v6e
topology: v6e:2x2x1
jax: 0.10.0
libtpu: 0.0.40
codegen_flags: <defaults>
</compile_context>

<pallas_src>
import functools

import jax
import jax.numpy as jnp
from jax.experimental import pallas as pl
from jax.experimental.pallas import tpu as pltpu


def _round_up(n, m):
    return ((n + m - 1) // m) * m


# -----------------------------------------------------------------------------
# Kernel: one batch tile through the fused 3-matmul network.
# All layout constants (slab offsets / sizes) are static Python ints closed
# over via functools.partial, so every in-kernel slice is static.
# -----------------------------------------------------------------------------
def nbeats_kernel(x_ref, p_ref, o_ref, *, t_in, t_out, c,
                  o_w1, o_b1, o_w2, o_b2, o_w3, o_b3):
    inp = x_ref[...]                                     # (TB, T_in) f32

    # Layer 1: (TB, T_in) @ (T_in, C) + b1, ReLU.       C = nb*H padded to 128
    w1 = p_ref[o_w1:o_w1 + t_in, :]
    b1 = p_ref[o_b1:o_b1 + 1, :]
    h = jnp.maximum(jnp.dot(inp, w1, preferred_element_type=jnp.float32) + b1, 0.0)

    # Layer 2 (block-diagonal, zero padded): (TB, C) @ (C, C) + b2, ReLU.
    w2 = p_ref[o_w2:o_w2 + c, :]
    b2 = p_ref[o_b2:o_b2 + 1, :]
    h = jnp.maximum(jnp.dot(h, w2, preferred_element_type=jnp.float32) + b2, 0.0)

    # Layer 3 + implicit sum over blocks: (TB, C) @ (C, C) + sum_b b3_b.
    # Only the first t_out output lanes are real; the rest are exact zeros.
    w3 = p_ref[o_w3:o_w3 + c, :]
    b3 = p_ref[o_b3:o_b3 + 1, :]
    out = jnp.dot(h, w3, preferred_element_type=jnp.float32) + b3

    o_ref[...] = out[:, :t_out].astype(o_ref.dtype)


# -----------------------------------------------------------------------------
# One-time parameter fusion + packing (runs once at init, NOT per forward call).
# -----------------------------------------------------------------------------
def prepare_packed_params(params, lane=128, sublane=8):
    """Fuse the nb_blocks MLPs and pack everything into one f32 slab.

    Returns (packed, meta):
      packed: (rows, C) f32, C = nb*H rounded up to 128 lanes; every piece
              starts on an 8-row boundary and is zero padded.
      meta:   static Python ints consumed by the kernel.
    """
    w1, b1 = params["w1"], params["b1"]        # (nb, T_in, H), (nb, H)
    w2, b2 = params["w2"], params["b2"]        # (nb, H, H),    (nb, H)
    w3, b3 = params["w3"], params["b3"]        # (nb, H, T_out),(nb, T_out)
    nb, t_in, hid = w1.shape
    t_out = w3.shape[-1]
    nbh = nb * hid
    c = _round_up(nbh, lane)
    assert t_out <= c, "output_window must fit in the padded feature width"
    # NOTE: the dense block-diagonal w2 is only "free" while nb*H fits in one
    # lane tile (<=128). For much wider models switch layer 2 back to a
    # per-block batched matmul instead of the (nb*H)^2 dense form.

    # Fused weights; feature index is b*H + h consistently across all three.
    w1f = jnp.transpose(w1, (1, 0, 2)).reshape(t_in, nbh)            # (T_in, nbH)
    b1f = b1.reshape(1, nbh)
    w2f = jnp.einsum("bij,bc->bicj", w2,
                     jnp.eye(nb, dtype=w2.dtype)).reshape(nbh, nbh)  # block-diag
    b2f = b2.reshape(1, nbh)
    w3f = w3.reshape(nbh, t_out)                                     # (nbH, T_out)
    b3f = b3.sum(axis=0).reshape(1, t_out)                           # sum over blocks

    t_in_p = _round_up(t_in, sublane)

    def pad(a, rows):
        return jnp.pad(a, ((0, rows - a.shape[0]), (0, c - a.shape[1])))

    o_w1 = 0
    o_b1 = o_w1 + t_in_p
    o_w2 = o_b1 + sublane
    o_b2 = o_w2 + c
    o_w3 = o_b2 + sublane
    o_b3 = o_w3 + c

    packed = jnp.concatenate([
        pad(w1f, t_in_p), pad(b1f, sublane),
        pad(w2f, c),      pad(b2f, sublane),
        pad(w3f, c),      pad(b3f, sublane),
    ], axis=0).astype(jnp.float32)

    meta = dict(t_in=t_in, t_out=t_out, c=c,
                o_w1=o_w1, o_b1=o_b1, o_w2=o_w2, o_b2=o_b2,
                o_w3=o_w3, o_b3=o_b3)
    return packed, meta


# -----------------------------------------------------------------------------
# Forward wrapper.
# -----------------------------------------------------------------------------
def make_nbeats_forward(meta, block_b=128):
    """Build a jitted forward(x, packed) -> (B, T_out)."""
    kern = functools.partial(nbeats_kernel, **meta)
    t_in, t_out = meta["t_in"], meta["t_out"]

    @jax.jit
    def forward(x, packed):
        B = x.shape[0]
        inp = x[:, :, -1]            # (B, T_in): last-feature select stays as glue

        if B <= block_b:
            # Single shot: no grid scaffolding, no per-step bookkeeping,
            # no double buffering of single-shot inputs. One input DMA each.
            return pl.pallas_call(
                kern,
                out_shape=jax.ShapeDtypeStruct((B, t_out), jnp.float32),
            )(inp, packed)

        # Batch-tiled path: weights stay VMEM-resident (constant index_map),
        # batch tiles pipeline DMA under compute and the "parallel" axis lets
        # v7x shard tiles across its two TensorCores.
        return pl.pallas_call(
            kern,
            out_shape=jax.ShapeDtypeStruct((B, t_out), jnp.float32),
            grid=(pl.cdiv(B, block_b),),
            in_specs=[pl.BlockSpec((block_b, t_in), lambda i: (i, 0)),
                      pl.BlockSpec(packed.shape, lambda i: (0, 0))],
            out_specs=pl.BlockSpec((block_b, t_out), lambda i: (i, 0)),
            compiler_params=pltpu.CompilerParams(
                dimension_semantics=("parallel",)),
        )(inp, packed)

    return forward


# -----------------------------------------------------------------------------
# Synthetic params + pure-JAX reference (reproduces the PyTorch per-block loop).
# -----------------------------------------------------------------------------
def init_params(key, nb_blocks, input_window, output_window, layer_width):
    """Deterministic synthetic weights, stored as (in, out) = nn.Linear.weight.T."""
    ks = jax.random.split(key, 6)
    s = 0.1
    return {
        "w1": s * jax.random.normal(ks[0], (nb_blocks, input_window, layer_width), jnp.float32),
        "b1": s * jax.random.normal(ks[1], (nb_blocks, layer_width), jnp.float32),
        "w2": s * jax.random.normal(ks[2], (nb_blocks, layer_width, layer_width), jnp.float32),
        "b2": s * jax.random.normal(ks[3], (nb_blocks, layer_width), jnp.float32),
        "w3": s * jax.random.normal(ks[4], (nb_blocks, layer_width, output_window), jnp.float32),
        "b3": s * jax.random.normal(ks[5], (nb_blocks, output_window), jnp.float32),
    }


def nbeats_reference(x, params):
    inp = x[:, :, -1]
    y = jnp.zeros((x.shape[0], params["w3"].shape[-1]), jnp.float32)
    for i in range(params["w1"].shape[0]):
        h = jnp.maximum(inp @ params["w1"][i] + params["b1"][i], 0.0)
        h = jnp.maximum(h @ params["w2"][i] + params["b2"][i], 0.0)
        y = y + (h @ params["w3"][i] + params["b3"][i])
    return y


if __name__ == "__main__":
    # Shapes consistent with the module's forward.
    B, input_window, output_window = 4, 16, 8
    n_features, layer_width, nb_blocks = 4, 32, 3

    key = jax.random.PRNGKey(0)
    kx, kp, kx2 = jax.random.split(key, 3)

    params = init_params(kp, nb_blocks, input_window, output_window, layer_width)

    # One-time fusion + packing, outside the per-call path.
    packed, meta = prepare_packed_params(params)
    packed = jax.block_until_ready(packed)

    forward = make_nbeats_forward(meta, block_b=128)

    # Toy batch: exercises the gridless single-shot path.
    x = jax.random.normal(kx, (B, input_window, n_features), jnp.float32)
    y = jax.block_until_ready(forward(x, packed))
    assert y.shape == (B, output_window)
    assert jnp.allclose(y, nbeats_reference(x, params), atol=1e-4, rtol=1e-4)

    # Larger batch: exercises the batch-tiled (grid) path with resident weights.
    B2 = 256
    x2 = jax.random.normal(kx2, (B2, input_window, n_features), jnp.float32)
    y2 = jax.block_until_ready(forward(x2, packed))
    assert y2.shape == (B2, output_window)
    assert jnp.allclose(y2, nbeats_reference(x2, params), atol=1e-4, rtol=1e-4)

    print("KERNEL_OK")
</pallas_src>

<mosaic_0001>
module attributes {stable_mosaic.version = 11 : i64} {
  func.func @nbeats_kernel(%arg0: memref<4x16xf32, #tpu.memory_space<vmem>>, %arg1: memref<296x128xf32, #tpu.memory_space<vmem>>, %arg2: memref<4x8xf32, #tpu.memory_space<vmem>>) attributes {dimension_semantics = [], scalar_prefetch = 0 : i64, scratch_operands = 0 : i64, tpu.core_type = #tpu.core_type<tc>} {
    %c0 = arith.constant 0 : index
    %c0_0 = arith.constant 0 : index
    %0 = vector.load %arg0[%c0, %c0_0] : memref<4x16xf32, #tpu.memory_space<vmem>>, vector<4x16xf32>
    %c0_1 = arith.constant 0 : index
    %c0_2 = arith.constant 0 : index
    %1 = vector.load %arg1[%c0_1, %c0_2] : memref<296x128xf32, #tpu.memory_space<vmem>>, vector<16x128xf32>
    %c16 = arith.constant 16 : index
    %c0_3 = arith.constant 0 : index
    %2 = vector.load %arg1[%c16, %c0_3] : memref<296x128xf32, #tpu.memory_space<vmem>>, vector<1x128xf32>
    %cst = arith.constant dense<0.000000e+00> : vector<4x128xf32>
    %3 = tpu.matmul %0, %1, %cst {dimension_numbers = #tpu.dot_dimension_numbers<[1], [0], [0], [1], [0, 0, 1, 1], [], []>} : vector<4x16xf32>, vector<16x128xf32>, vector<4x128xf32> -> vector<4x128xf32>
    %4 = vector.broadcast %2 : vector<1x128xf32> to vector<4x128xf32>
    %5 = arith.addf %3, %4 : vector<4x128xf32>
    %cst_4 = arith.constant 0.000000e+00 : f32
    %6 = vector.broadcast %cst_4 : f32 to vector<4x128xf32>
    %7 = arith.maximumf %5, %6 : vector<4x128xf32>
    %c24 = arith.constant 24 : index
    %c0_5 = arith.constant 0 : index
    %8 = vector.load %arg1[%c24, %c0_5] : memref<296x128xf32, #tpu.memory_space<vmem>>, vector<128x128xf32>
    %c152 = arith.constant 152 : index
    %c0_6 = arith.constant 0 : index
    %9 = vector.load %arg1[%c152, %c0_6] : memref<296x128xf32, #tpu.memory_space<vmem>>, vector<1x128xf32>
    %cst_7 = arith.constant dense<0.000000e+00> : vector<4x128xf32>
    %10 = tpu.matmul %7, %8, %cst_7 {dimension_numbers = #tpu.dot_dimension_numbers<[1], [0], [0], [1], [0, 0, 1, 1], [], []>} : vector<4x128xf32>, vector<128x128xf32>, vector<4x128xf32> -> vector<4x128xf32>
    %11 = vector.broadcast %9 : vector<1x128xf32> to vector<4x128xf32>
    %12 = arith.addf %10, %11 : vector<4x128xf32>
    %cst_8 = arith.constant 0.000000e+00 : f32
    %13 = vector.broadcast %cst_8 : f32 to vector<4x128xf32>
    %14 = arith.maximumf %12, %13 : vector<4x128xf32>
    %c160 = arith.constant 160 : index
    %c0_9 = arith.constant 0 : index
    %15 = vector.load %arg1[%c160, %c0_9] : memref<296x128xf32, #tpu.memory_space<vmem>>, vector<128x128xf32>
    %c288 = arith.constant 288 : index
    %c0_10 = arith.constant 0 : index
    %16 = vector.load %arg1[%c288, %c0_10] : memref<296x128xf32, #tpu.memory_space<vmem>>, vector<1x128xf32>
    %cst_11 = arith.constant dense<0.000000e+00> : vector<4x128xf32>
    %17 = tpu.matmul %14, %15, %cst_11 {dimension_numbers = #tpu.dot_dimension_numbers<[1], [0], [0], [1], [0, 0, 1, 1], [], []>} : vector<4x128xf32>, vector<128x128xf32>, vector<4x128xf32> -> vector<4x128xf32>
    %18 = vector.broadcast %16 : vector<1x128xf32> to vector<4x128xf32>
    %19 = arith.addf %17, %18 : vector<4x128xf32>
    %20 = vector.extract_strided_slice %19 {offsets = [0, 0], sizes = [4, 8], strides = [1, 1]} : vector<4x128xf32> to vector<4x8xf32>
    %c0_12 = arith.constant 0 : index
    %c0_13 = arith.constant 0 : index
    %21 = vector.load %arg2[%c0_12, %c0_13] : memref<4x8xf32, #tpu.memory_space<vmem>>, vector<4x8xf32>
    tpu.vector_store %arg2[%c0_12, %c0_13], %20 {strides = array<i32>} : memref<4x8xf32, #tpu.memory_space<vmem>>, vector<4x8xf32>,
    return
  }
}

</mosaic_0001>

<llo_original>
// kernel: forward.1
$region0: #{forward.1}
  #allocation0 [shape = 'u32[]', space=smem, size = 0x4, offset = 0x4, fixed_abs, tag = 'smem constant byte address 0x4 - core index']
  #allocation1 [shape = 'u32[144,128]{1,0:T(1,128)}', space=vmem, size = 0x12000, scoped, tag = 'internal scratch']
  %s0 = inlined_call_operand.vmem [shape: f32[4,16], index: 0, kind: input, shape index: {}]
  %s1 = inlined_call_operand.hbm [shape: f32[296,128], index: 1, kind: input, shape index: {}]
  %s2 = inlined_call_operand.hbm [shape: f32[4,8], index: 2, kind: output, shape index: {}]
  %s3 = sld [smem:[#allocation0]]
  $region22: #{forward.1} parent=0
    _
  %s5 = ssub.s32 1, %s3
  %s6 = scalar_select 0, %s5, %s3
  $region1: #{forward.1} parent=0
    #allocation2 [shape = 'u8[151552]{0}', space=vmem, size = 0x25000, scoped, tag = 'input window, operand 1, single buffered']
    #allocation3 [shape = 's32[1]{0}', space=sflag, size = 0x4, scoped, tag = 'scoped memory for forward.1']
    #allocation4 [shape = 's32[1]{0}', space=sflag, size = 0x4, scoped, tag = 'scoped memory for forward.1']
    #allocation5 [shape = 'u8[2048]{0}', space=vmem, size = 0x800, scoped, tag = 'output window, operand 0, single buffered']
    %7 = vsyncpa [#allocation3], 0
    %8 = vsyncpa [#allocation4], 0
    // Predicated region
    $region2: #{forward.1} parent=1 // pred_check
      _
    $region3: #{forward.1} parent=1 // pred_check_branch
      %10 = sbr.rel (0) target = $region5
    $region4: #{forward.1} parent=1 // pred_region
      _
    $region5: #{forward.1} parent=1 // pred_fallthru
      _
    // Predicated region
    $region6: #{forward.1} parent=1 // pred_check
      _
    $region7: #{forward.1} parent=1 // pred_check_branch
      %12 = sbr.rel (0) target = $region9
    $region8: #{forward.1} parent=1 // pred_region
      %s14 = ssub.s32 4736, 4736
      %15 = vsyncadd [#allocation3], %s14
      %s16 = sshll.u32 [#allocation2], 4
      %s17 = int_to_ptr.vmem [resolvable:$true] %s16
      %22 = dma.hbm_to_vmem [thread:$0]  %s1, 4736, %s17, [#allocation3], 128, 128, 8
    $region9: #{forward.1} parent=1 // pred_fallthru
      _
    // Predicated region
    $region10: #{forward.1} parent=1 // pred_check
      _
    $region11: #{forward.1} parent=1 // pred_check_branch
      %24 = sbr.rel (0) target = $region13
    $region12: #{forward.1} parent=1 // pred_region
      %25 = dma.done [#allocation3], 4736
    $region13: #{forward.1} parent=1 // pred_fallthru
      _
    %v26 = vld [vmem:[%s0] sm:$0xf]
    %v27 = vld [vmem:[#allocation2] sm:$0xff]
    %v28 = vld [vmem:[#allocation2 + $0x8] sm:$0xff]
    %v29 = vld [vmem:[#allocation2 + $0x10] sm:$0x1]
    %v30 = vlaneseq
    %v31 = vshrl.u32 %v30, 7
    %v32 = vsub.s32 0, %v31
    %v33 = vrot.slane %v29, %v32
    %vm34 = vcmask 130048
    %v36 = vsel %vm34, %v26, 0
    %38 = vmatprep.subr.mxu0 0.0
    %39 = vmatpush1.msra.mxu0 0.0
    %40 = vmatprep.subr.mxu0 0.0
    %41 = vmatpush1.msra.mxu0 0.0
    %42 = vmatprep.subr.mxu0 0.0
    %43 = vmatpush1.msra.mxu0 0.0
    %44 = vmatprep.subr.mxu0 0.0
    %45 = vmatpush1.msra.mxu0 0.0
    %46 = vmatprep.subr.mxu0 0.0
    %47 = vmatpush1.msra.mxu0 0.0
    %48 = vmatprep.subr.mxu0 0.0
    %49 = vmatpush1.msra.mxu0 0.0
    %50 = vmatprep.subr.mxu0 0.0
    %51 = vmatpush1.msra.mxu0 0.0
    %52 = vmatprep.subr.mxu0 0.0
    %53 = vmatpush1.msra.mxu0 0.0
    %54 = vmatprep.subr.mxu0 0.0
    %55 = vmatpush1.msra.mxu0 0.0
    %56 = vmatprep.subr.mxu0 0.0
    %57 = vmatpush1.msra.mxu0 0.0
    %58 = vmatprep.subr.mxu0 0.0
    %59 = vmatpush1.msra.mxu0 0.0
    %60 = vmatprep.subr.mxu0 0.0
    %61 = vmatpush1.msra.mxu0 0.0
    %62 = vmatprep.subr.mxu0 0.0
    %63 = vmatpush1.msra.mxu0 0.0
    %64 = vmatprep.subr.mxu0 0.0
    %65 = vmatpush1.msra.mxu0 0.0
    %66 = vmatprep.subr.mxu0 0.0
    %67 = vmatpush1.msra.mxu0 %v28
    %68 = vmatprep.subr.mxu0 0.0
    %69 = vmatpush1.msra.mxu0 %v27
    %70 = vmatprep.subr.mxu0 0.0
    %71 = vmatpush2.msra.mxu0 0.0
    %72 = vmatprep.subr.mxu0 0.0
    %73 = vmatpush2.msra.mxu0 0.0
    %74 = vmatprep.subr.mxu0 0.0
    %75 = vmatpush2.msra.mxu0 0.0
    %76 = vmatprep.subr.mxu0 0.0
    %77 = vmatpush2.msra.mxu0 0.0
    %78 = vmatprep.subr.mxu0 0.0
    %79 = vmatpush2.msra.mxu0 0.0
    %80 = vmatprep.subr.mxu0 0.0
    %81 = vmatpush2.msra.mxu0 0.0
    %82 = vmatprep.subr.mxu0 0.0
    %83 = vmatpush2.msra.mxu0 0.0
    %84 = vmatprep.subr.mxu0 0.0
    %85 = vmatpush2.msra.mxu0 0.0
    %86 = vmatprep.subr.mxu0 0.0
    %87 = vmatpush2.msra.mxu0 0.0
    %88 = vmatprep.subr.mxu0 0.0
    %89 = vmatpush2.msra.mxu0 0.0
    %90 = vmatprep.subr.mxu0 0.0
    %91 = vmatpush2.msra.mxu0 0.0
    %92 = vmatprep.subr.mxu0 0.0
    %93 = vmatpush2.msra.mxu0 0.0
    %94 = vmatprep.subr.mxu0 0.0
    %95 = vmatpush2.msra.mxu0 0.0
    %96 = vmatprep.subr.mxu0 0.0
    %97 = vmatpush2.msra.mxu0 0.0
    %98 = vmatprep.subr.mxu0 0.0
    %99 = vmatpush2.msra.mxu0 0.0
    %100 = vmatprep.subr.mxu0 0.0
    %101 = vmatpush2.msra.mxu0 0.0
    %102 = vmatprep.mubr.f32.mxu0 0.0
    %103 = vmatmul.mubr.f32.gmra.mxu0 %v36
    %v104 = vpop.f32.mrf.mxu0
    %v105 = vadd.f32 %v33, %v104
    %v106 = vpop.f32.mrf.mxu0
    %107 = vdwg.mxu0
    %v108 = vmax.f32 %v105, 0.0
    %v109 = vld [vmem:[#allocation2 + $0x18] sm:$0xff]
    %v110 = vld [vmem:[#allocation2 + $0x20] sm:$0xff]
    %v111 = vld [vmem:[#allocation2 + $0x28] sm:$0xff]
    %v112 = vld [vmem:[#allocation2 + $0x30] sm:$0xff]
    %v113 = vld [vmem:[#allocation2 + $0x38] sm:$0xff]
    %v114 = vld [vmem:[#allocation2 + $0x40] sm:$0xff]
    %v115 = vld [vmem:[#allocation2 + $0x48] sm:$0xff]
    %v116 = vld [vmem:[#allocation2 + $0x50] sm:$0xff]
    %v117 = vld [vmem:[#allocation2 + $0x58] sm:$0xff]
    %v118 = vld [vmem:[#allocation2 + $0x60] sm:$0xff]
    %v119 = vld [vmem:[#allocation2 + $0x68] sm:$0xff]
    %v120 = vld [vmem:[#allocation2 + $0x70] sm:$0xff]
    %v121 = vld [vmem:[#allocation2 + $0x78] sm:$0xff]
    %v122 = vld [vmem:[#allocation2 + $0x80] sm:$0xff]
    %v123 = vld [vmem:[#allocation2 + $0x88] sm:$0xff]
    %v124 = vld [vmem:[#allocation2 + $0x90] sm:$0xff]
    %v125 = vld [vmem:[#allocation2 + $0x98] sm:$0x1]
    %v126 = vlaneseq
    %v127 = vshrl.u32 %v126, 7
    %v128 = vsub.s32 0, %v127
    %v129 = vrot.slane %v125, %v128
    %130 = vmatprep.subr.mxu0 0.0
    %131 = vmatpush1.msra.mxu0 %v124
    %132 = vmatprep.subr.mxu0 0.0
    %133 = vmatpush1.msra.mxu0 %v123
    %134 = vmatprep.subr.mxu0 0.0
    %135 = vmatpush1.msra.mxu0 %v122
    %136 = vmatprep.subr.mxu0 0.0
    %137 = vmatpush1.msra.mxu0 %v121
    %138 = vmatprep.subr.mxu0 0.0
    %139 = vmatpush1.msra.mxu0 %v120
    %140 = vmatprep.subr.mxu0 0.0
    %141 = vmatpush1.msra.mxu0 %v119
    %142 = vmatprep.subr.mxu0 0.0
    %143 = vmatpush1.msra.mxu0 %v118
    %144 = vmatprep.subr.mxu0 0.0
    %145 = vmatpush1.msra.mxu0 %v117
    %146 = vmatprep.subr.mxu0 0.0
    %147 = vmatpush1.msra.mxu0 %v116
    %148 = vmatprep.subr.mxu0 0.0
    %149 = vmatpush1.msra.mxu0 %v115
    %150 = vmatprep.subr.mxu0 0.0
    %151 = vmatpush1.msra.mxu0 %v114
    %152 = vmatprep.subr.mxu0 0.0
    %153 = vmatpush1.msra.mxu0 %v113
    %154 = vmatprep.subr.mxu0 0.0
    %155 = vmatpush1.msra.mxu0 %v112
    %156 = vmatprep.subr.mxu0 0.0
    %157 = vmatpush1.msra.mxu0 %v111
    %158 = vmatprep.subr.mxu0 0.0
    %159 = vmatpush1.msra.mxu0 %v110
    %160 = vmatprep.subr.mxu0 0.0
    %161 = vmatpush1.msra.mxu0 %v109
    %162 = vmatprep.subr.mxu0 0.0
    %163 = vmatpush2.msra.mxu0 0.0
    %164 = vmatprep.subr.mxu0 0.0
    %165 = vmatpush2.msra.mxu0 0.0
    %166 = vmatprep.subr.mxu0 0.0
    %167 = vmatpush2.msra.mxu0 0.0
    %168 = vmatprep.subr.mxu0 0.0
    %169 = vmatpush2.msra.mxu0 0.0
    %170 = vmatprep.subr.mxu0 0.0
    %171 = vmatpush2.msra.mxu0 0.0
    %172 = vmatprep.subr.mxu0 0.0
    %173 = vmatpush2.msra.mxu0 0.0
    %174 = vmatprep.subr.mxu0 0.0
    %175 = vmatpush2.msra.mxu0 0.0
    %176 = vmatprep.subr.mxu0 0.0
    %177 = vmatpush2.msra.mxu0 0.0
    %178 = vmatprep.subr.mxu0 0.0
    %179 = vmatpush2.msra.mxu0 0.0
    %180 = vmatprep.subr.mxu0 0.0
    %181 = vmatpush2.msra.mxu0 0.0
    %182 = vmatprep.subr.mxu0 0.0
    %183 = vmatpush2.msra.mxu0 0.0
    %184 = vmatprep.subr.mxu0 0.0
    %185 = vmatpush2.msra.mxu0 0.0
    %186 = vmatprep.subr.mxu0 0.0
    %187 = vmatpush2.msra.mxu0 0.0
    %188 = vmatprep.subr.mxu0 0.0
    %189 = vmatpush2.msra.mxu0 0.0
    %190 = vmatprep.subr.mxu0 0.0
    %191 = vmatpush2.msra.mxu0 0.0
    %192 = vmatprep.subr.mxu0 0.0
    %193 = vmatpush2.msra.mxu0 0.0
    %194 = vmatprep.mubr.f32.mxu0 0.0
    %195 = vmatmul.mubr.f32.gmra.mxu0 %v108
    %v196 = vpop.f32.mrf.mxu0
    %v197 = vadd.f32 %v129, %v196
    %v198 = vpop.f32.mrf.mxu0
    %199 = vdwg.mxu0
    %v200 = vmax.f32 %v197, 0.0
    %v201 = vld [vmem:[#allocation2 + $0xa0] sm:$0xff]
    %v202 = vld [vmem:[#allocation2 + $0xa8] sm:$0xff]
    %v203 = vld [vmem:[#allocation2 + $0xb0] sm:$0xff]
    %v204 = vld [vmem:[#allocation2 + $0xb8] sm:$0xff]
    %v205 = vld [vmem:[#allocation2 + $0xc0] sm:$0xff]
    %v206 = vld [vmem:[#allocation2 + $0xc8] sm:$0xff]
    %v207 = vld [vmem:[#allocation2 + $0xd0] sm:$0xff]
    %v208 = vld [vmem:[#allocation2 + $0xd8] sm:$0xff]
    %v209 = vld [vmem:[#allocation2 + $0xe0] sm:$0xff]
    %v210 = vld [vmem:[#allocation2 + $0xe8] sm:$0xff]
    %v211 = vld [vmem:[#allocation2 + $0xf0] sm:$0xff]
    %v212 = vld [vmem:[#allocation2 + $0xf8] sm:$0xff]
    %v213 = vld [vmem:[#allocation2 + $0x100] sm:$0xff]
    %v214 = vld [vmem:[#allocation2 + $0x108] sm:$0xff]
    %v215 = vld [vmem:[#allocation2 + $0x110] sm:$0xff]
    %v216 = vld [vmem:[#allocation2 + $0x118] sm:$0xff]
    %v217 = vld [vmem:[#allocation2 + $0x120] sm:$0x1]
    %v218 = vlaneseq
    %v219 = vshrl.u32 %v218, 7
    %v220 = vsub.s32 0, %v219
    %v221 = vrot.slane %v217, %v220
    %222 = vmatprep.subr.mxu0 0.0
    %223 = vmatpush1.msra.mxu0 %v216
    %224 = vmatprep.subr.mxu0 0.0
    %225 = vmatpush1.msra.mxu0 %v215
    %226 = vmatprep.subr.mxu0 0.0
    %227 = vmatpush1.msra.mxu0 %v214
    %228 = vmatprep.subr.mxu0 0.0
    %229 = vmatpush1.msra.mxu0 %v213
    %230 = vmatprep.subr.mxu0 0.0
    %231 = vmatpush1.msra.mxu0 %v212
    %232 = vmatprep.subr.mxu0 0.0
    %233 = vmatpush1.msra.mxu0 %v211
    %234 = vmatprep.subr.mxu0 0.0
    %235 = vmatpush1.msra.mxu0 %v210
    %236 = vmatprep.subr.mxu0 0.0
    %237 = vmatpush1.msra.mxu0 %v209
    %238 = vmatprep.subr.mxu0 0.0
    %239 = vmatpush1.msra.mxu0 %v208
    %240 = vmatprep.subr.mxu0 0.0
    %241 = vmatpush1.msra.mxu0 %v207
    %242 = vmatprep.subr.mxu0 0.0
    %243 = vmatpush1.msra.mxu0 %v206
    %244 = vmatprep.subr.mxu0 0.0
    %245 = vmatpush1.msra.mxu0 %v205
    %246 = vmatprep.subr.mxu0 0.0
    %247 = vmatpush1.msra.mxu0 %v204
    %248 = vmatprep.subr.mxu0 0.0
    %249 = vmatpush1.msra.mxu0 %v203
    %250 = vmatprep.subr.mxu0 0.0
    %251 = vmatpush1.msra.mxu0 %v202
    %252 = vmatprep.subr.mxu0 0.0
    %253 = vmatpush1.msra.mxu0 %v201
    %254 = vmatprep.subr.mxu0 0.0
    %255 = vmatpush2.msra.mxu0 0.0
    %256 = vmatprep.subr.mxu0 0.0
    %257 = vmatpush2.msra.mxu0 0.0
    %258 = vmatprep.subr.mxu0 0.0
    %259 = vmatpush2.msra.mxu0 0.0
    %260 = vmatprep.subr.mxu0 0.0
    %261 = vmatpush2.msra.mxu0 0.0
    %262 = vmatprep.subr.mxu0 0.0
    %263 = vmatpush2.msra.mxu0 0.0
    %264 = vmatprep.subr.mxu0 0.0
    %265 = vmatpush2.msra.mxu0 0.0
    %266 = vmatprep.subr.mxu0 0.0
    %267 = vmatpush2.msra.mxu0 0.0
    %268 = vmatprep.subr.mxu0 0.0
    %269 = vmatpush2.msra.mxu0 0.0
    %270 = vmatprep.subr.mxu0 0.0
    %271 = vmatpush2.msra.mxu0 0.0
    %272 = vmatprep.subr.mxu0 0.0
    %273 = vmatpush2.msra.mxu0 0.0
    %274 = vmatprep.subr.mxu0 0.0
    %275 = vmatpush2.msra.mxu0 0.0
    %276 = vmatprep.subr.mxu0 0.0
    %277 = vmatpush2.msra.mxu0 0.0
    %278 = vmatprep.subr.mxu0 0.0
    %279 = vmatpush2.msra.mxu0 0.0
    %280 = vmatprep.subr.mxu0 0.0
    %281 = vmatpush2.msra.mxu0 0.0
    %282 = vmatprep.subr.mxu0 0.0
    %283 = vmatpush2.msra.mxu0 0.0
    %284 = vmatprep.subr.mxu0 0.0
    %285 = vmatpush2.msra.mxu0 0.0
    %286 = vmatprep.mubr.f32.mxu0 0.0
    %287 = vmatmul.mubr.f32.gmra.mxu0 %v200
    %v288 = vpop.f32.mrf.mxu0
    %v289 = vadd.f32 %v221, %v288
    %v290 = vpop.f32.mrf.mxu0
    %291 = vdwg.mxu0
    %vm292 = vcmask 60416
    %293 = vst.msk [vmem:[#allocation5] sm:$0xf] %vm292, %v289
    // Predicated region
    $region14: #{forward.1} parent=1 // pred_check
      _
    $region15: #{forward.1} parent=1 // pred_check_branch
      %295 = sbr.rel (0) target = $region17
    $region16: #{forward.1} parent=1 // pred_region
      %s297 = ssub.s32 64, 64
      %298 = vsyncadd [#allocation4], %s297
      %s300 = sshll.u32 [#allocation5], 4
      %s301 = int_to_ptr.vmem [resolvable:$true] %s300
      %303 = dma.vmem_to_hbm [thread:$0]  %s301, 64, %s2, [#allocation4]
    $region17: #{forward.1} parent=1 // pred_fallthru
      _
    // Predicated region
    $region18: #{forward.1} parent=1 // pred_check
      _
    $region19: #{forward.1} parent=1 // pred_check_branch
      %305 = sbr.rel (0) target = $region21
    $region20: #{forward.1} parent=1 // pred_region
      %306 = dma.done [#allocation4], 64
    $region21: #{forward.1} parent=1 // pred_fallthru
      _
    %307 = vsyncpa [#allocation3], 1
    %308 = vsyncpa [#allocation4], 1

</llo_original>
